<compile_context>
chip_gen: v5e
topology: v5e:2x2
jax: 0.10.0
libtpu: 0.0.40
codegen_flags: <defaults>
</compile_context>

<pallas_src>
import functools

import jax
import jax.numpy as jnp
from jax.experimental import pallas as pl
from jax.experimental.pallas import tpu as pltpu


# ---------------------------------------------------------------------------
# Model hyper-parameters (from the reference script).
# ---------------------------------------------------------------------------
EMBED = 256      # embedding_dim / embed_size
MAX_LEN = 50     # max_len
BATCH = 2
SEQ = 8


# ---------------------------------------------------------------------------
# Kernel: broadcast-add of the positional table over the batch dimension.
#   x_ref / o_ref : (TILE_B, S, E)   pe_ref : (max_len, E)  (full, resident)
# ---------------------------------------------------------------------------
def _add_pe_kernel(x_ref, pe_ref, o_ref, *, seq_len):
    o_ref[...] = x_ref[...] + pe_ref[0:seq_len, :][None, :, :]


def _pick_tile_b(batch, seq, embed, itemsize, target_bytes=2 * 1024 * 1024):
    """Pick a batch tile so each block is ~2 MiB (>=512 flattened rows for
    realistic E), leaving ample headroom under every generation's scoped
    VMEM (16 MiB v5e / 32 MiB v6e,v7x) with double-buffered in+out blocks."""
    row_bytes = seq * embed * itemsize
    tile_b = max(1, target_bytes // max(row_bytes, 1))
    return int(min(batch, tile_b))


# ---------------------------------------------------------------------------
# Wrapper
# ---------------------------------------------------------------------------
def positional_encoding_forward(x, pe, *, tile_b=None):
    """x: (B, S, E); pe: (max_len, E). Returns x + pe[:S] (or x if S > max_len)."""
    B, S, E = x.shape
    max_len = pe.shape[0]

    if S > max_len:
        # Reference semantics: table too short -> pass-through, no kernel.
        return x

    # Cast the table to the activation dtype outside the kernel.
    pe = pe.astype(x.dtype)

    kernel = functools.partial(_add_pe_kernel, seq_len=S)

    if tile_b is None:
        tile_b = _pick_tile_b(B, S, E, x.dtype.itemsize)

    if tile_b >= B:
        # Everything (x, pe, out) fits comfortably in VMEM: one un-gridded
        # call, whole arrays as VMEM refs, no pipeline bookkeeping at all.
        return pl.pallas_call(
            kernel,
            out_shape=jax.ShapeDtypeStruct(x.shape, x.dtype),
            input_output_aliases={0: 0},   # in-place add when x is donated
        )(x, pe)

    # Large batch: tile only the batch axis.  The trailing (S, E) dims of each
    # x/out block are the FULL array dims, so the (8,128) rule holds for any S
    # and E; the pe table is one full-shape block with a constant index_map,
    # so it is fetched once and stays VMEM-resident across the whole grid.
    grid = (pl.cdiv(B, tile_b),)
    return pl.pallas_call(
        kernel,
        out_shape=jax.ShapeDtypeStruct(x.shape, x.dtype),
        grid=grid,
        in_specs=[
            pl.BlockSpec((tile_b, S, E), lambda b: (b, 0, 0)),
            pl.BlockSpec((max_len, E), lambda b: (0, 0)),
        ],
        out_specs=pl.BlockSpec((tile_b, S, E), lambda b: (b, 0, 0)),
        input_output_aliases={0: 0},
        compiler_params=pltpu.CompilerParams(
            # Batch blocks are independent: shard across TensorCores
            # (matters on v7x's 2 TCs; measured no-op on v5e/v6e).
            dimension_semantics=("parallel",),
        ),
    )(x, pe)


# ---------------------------------------------------------------------------
# Positional-encoding table (matches the PyTorch constructor).
# ---------------------------------------------------------------------------
def make_positional_encoding(max_len, embed):
    position = jnp.arange(max_len, dtype=jnp.float32)[:, None]           # (L, 1)
    log_term = -jnp.log(jnp.float32(10000.0)) / embed
    div_term = jnp.exp(jnp.arange(0, embed, 2, dtype=jnp.float32) * log_term)
    ang = position * div_term                                            # (L, E/2)
    pe = jnp.zeros((max_len, embed), dtype=jnp.float32)
    pe = pe.at[:, 0::2].set(jnp.sin(ang))
    pe = pe.at[:, 1::2].set(jnp.cos(ang))
    return pe                                                            # (L, E)


# ---------------------------------------------------------------------------
if __name__ == "__main__":
    pe = make_positional_encoding(MAX_LEN, EMBED)

    fwd = jax.jit(positional_encoding_forward,
                  static_argnames=("tile_b",),
                  donate_argnums=(0,))

    # --- 1) module-default small shapes: un-gridded VMEM path --------------
    x = jax.random.normal(jax.random.PRNGKey(0), (BATCH, SEQ, EMBED), jnp.float32)
    ref = x + pe[:SEQ][None, :, :]            # reference computed BEFORE donation
    out = jax.block_until_ready(fwd(x, pe))
    assert out.shape == (BATCH, SEQ, EMBED)
    assert jnp.all(jnp.isfinite(out))
    assert jnp.allclose(out, ref, atol=1e-6, rtol=1e-6)

    # --- 2) larger batch: tiled (gridded) path over the batch axis ---------
    x2 = jax.random.normal(jax.random.PRNGKey(1), (16, SEQ, EMBED), jnp.float32)
    ref2 = x2 + pe[:SEQ][None, :, :]
    out2 = jax.block_until_ready(fwd(x2, pe, tile_b=4))
    assert jnp.allclose(out2, ref2, atol=1e-6, rtol=1e-6)

    # --- 3) seq_len > max_len: reference semantics are a pass-through ------
    x3 = jax.random.normal(jax.random.PRNGKey(2), (2, MAX_LEN + 4, EMBED), jnp.float32)
    ref3 = x3 * 1.0                            # keep a copy before donation
    out3 = jax.block_until_ready(fwd(x3, pe))
    assert jnp.allclose(out3, ref3)

    print("KERNEL_OK")
</pallas_src>

<mosaic_0001>
module attributes {stable_mosaic.version = 11 : i64} {
  func.func @_add_pe_kernel(%arg0: memref<2x8x256xf32, #tpu.memory_space<vmem>>, %arg1: memref<50x256xf32, #tpu.memory_space<vmem>>, %arg2: memref<2x8x256xf32, #tpu.memory_space<vmem>>) attributes {dimension_semantics = [], scalar_prefetch = 0 : i64, scratch_operands = 0 : i64, tpu.core_type = #tpu.core_type<tc>} {
    %c0 = arith.constant 0 : index
    %c0_0 = arith.constant 0 : index
    %c0_1 = arith.constant 0 : index
    %0 = vector.load %arg0[%c0, %c0_0, %c0_1] : memref<2x8x256xf32, #tpu.memory_space<vmem>>, vector<2x8x256xf32>
    %c0_2 = arith.constant 0 : index
    %c0_3 = arith.constant 0 : index
    %1 = vector.load %arg1[%c0_2, %c0_3] : memref<50x256xf32, #tpu.memory_space<vmem>>, vector<8x256xf32>
    %2 = vector.shape_cast %1 : vector<8x256xf32> to vector<1x8x256xf32>
    %3 = vector.broadcast %2 : vector<1x8x256xf32> to vector<2x8x256xf32>
    %4 = arith.addf %0, %3 : vector<2x8x256xf32>
    %c0_4 = arith.constant 0 : index
    %c0_5 = arith.constant 0 : index
    %c0_6 = arith.constant 0 : index
    %5 = vector.load %arg2[%c0_4, %c0_5, %c0_6] : memref<2x8x256xf32, #tpu.memory_space<vmem>>, vector<2x8x256xf32>
    tpu.vector_store %arg2[%c0_4, %c0_5, %c0_6], %4 {strides = array<i32>} : memref<2x8x256xf32, #tpu.memory_space<vmem>>, vector<2x8x256xf32>,
    return
  }
}

</mosaic_0001>

<llo_original>
// kernel: positional_encoding_forward.1
$region0: #{positional_encoding_forward.1}
  #allocation0 [shape = 'u32[]', space=smem, size = 0x4, offset = 0x4, fixed_abs, tag = 'smem constant byte address 0x4 - core index']
  #allocation1 [shape = 'u32[72,128]{1,0:T(1,128)}', space=vmem, size = 0x9000, scoped, tag = 'internal scratch']
  %s0 = inlined_call_operand.hbm [shape: f32[2,8,256], index: 0, kind: input, shape index: {}, may-alias: {0,2}]
  %s1 = inlined_call_operand.hbm [shape: f32[50,256], index: 1, kind: input, shape index: {}]
  %s2 = inlined_call_operand.hbm [shape: f32[2,8,256], index: 2, kind: output, shape index: {}, may-alias: {0,2}]
  %s3 = sld [smem:[#allocation0]]
  $region26: #{positional_encoding_forward.1} parent=0
    _
  %s5 = ssub.s32 1, %s3
  %s6 = scalar_select 0, %s5, %s3
  $region1: #{positional_encoding_forward.1} parent=0
    #allocation2 [shape = 'u8[16384]{0}', space=vmem, size = 0x4000, scoped, tag = 'input window, operand 0, single buffered']
    #allocation3 [shape = 's32[1]{0}', space=sflag, size = 0x4, scoped, tag = 'scoped memory for positional_encoding_forward.1']
    #allocation4 [shape = 's32[1]{0}', space=sflag, size = 0x4, scoped, tag = 'scoped memory for positional_encoding_forward.1']
    #allocation5 [shape = 'u8[57344]{0}', space=vmem, size = 0xe000, scoped, tag = 'input window, operand 1, single buffered']
    #allocation6 [shape = 's32[1]{0}', space=sflag, size = 0x4, scoped, tag = 'scoped memory for positional_encoding_forward.1']
    #allocation7 [shape = 'u8[16384]{0}', space=vmem, size = 0x4000, scoped, tag = 'output window, operand 0, single buffered']
    %7 = vsyncpa [#allocation3], 0
    %8 = vsyncpa [#allocation6], 0
    %9 = vsyncpa [#allocation4], 0
    // Predicated region
    $region2: #{positional_encoding_forward.1} parent=1 // pred_check
      _
    $region3: #{positional_encoding_forward.1} parent=1 // pred_check_branch
      %11 = sbr.rel (0) target = $region5
    $region4: #{positional_encoding_forward.1} parent=1 // pred_region
      %13 = vsyncadd [#allocation3], 0
      %s14 = sshll.u32 %s0, 4
      %s15 = int_to_ptr.hbm [resolvable:$true] %s14
      %s16 = sshll.u32 [#allocation2], 4
      %s17 = int_to_ptr.vmem [resolvable:$true] %s16
      %22 = dma.hbm_to_vmem [thread:$0]  %s15, 512, %s17, [#allocation3], 256, 256, 16
    $region5: #{positional_encoding_forward.1} parent=1 // pred_fallthru
      _
    // Predicated region
    $region6: #{positional_encoding_forward.1} parent=1 // pred_check
      _
    $region7: #{positional_encoding_forward.1} parent=1 // pred_check_branch
      %24 = sbr.rel (0) target = $region9
    $region8: #{positional_encoding_forward.1} parent=1 // pred_region
      %26 = vsyncadd [#allocation6], 0
      %s27 = sshll.u32 %s1, 4
      %s28 = int_to_ptr.hbm [resolvable:$true] %s27
      %s29 = sshll.u32 [#allocation5], 4
      %s30 = int_to_ptr.vmem [resolvable:$true] %s29
      %35 = dma.hbm_to_vmem [thread:$0]  %s28, 1792, %s30, [#allocation6], 256, 256, 16
    $region9: #{positional_encoding_forward.1} parent=1 // pred_fallthru
      _
    // Predicated region
    $region10: #{positional_encoding_forward.1} parent=1 // pred_check
      _
    $region11: #{positional_encoding_forward.1} parent=1 // pred_check_branch
      %37 = sbr.rel (0) target = $region13
    $region12: #{positional_encoding_forward.1} parent=1 // pred_region
      %39 = dma.done [#allocation3], 512
    $region13: #{positional_encoding_forward.1} parent=1 // pred_fallthru
      _
    // Predicated region
    $region14: #{positional_encoding_forward.1} parent=1 // pred_check
      _
    $region15: #{positional_encoding_forward.1} parent=1 // pred_check_branch
      %41 = sbr.rel (0) target = $region17
    $region16: #{positional_encoding_forward.1} parent=1 // pred_region
      %43 = dma.done [#allocation6], 1792
    $region17: #{positional_encoding_forward.1} parent=1 // pred_fallthru
      _
    %v44 = vld [vmem:[#allocation2] sm:$0xff]
    %v45 = vld [vmem:[#allocation2 + $0x8] sm:$0xff]
    %v46 = vld [vmem:[#allocation2 + $0x10] sm:$0xff]
    %v47 = vld [vmem:[#allocation2 + $0x18] sm:$0xff]
    %v48 = vld [vmem:[#allocation5] sm:$0xff]
    %v49 = vld [vmem:[#allocation5 + $0x8] sm:$0xff]
    %v50 = vadd.f32 %v44, %v48
    %v51 = vadd.f32 %v45, %v49
    %v52 = vadd.f32 %v46, %v48
    %v53 = vadd.f32 %v47, %v49
    %54 = vst [vmem:[#allocation7] sm:$0xff] %v50
    %55 = vst [vmem:[#allocation7 + $0x8] sm:$0xff] %v51
    %56 = vst [vmem:[#allocation7 + $0x10] sm:$0xff] %v52
    %57 = vst [vmem:[#allocation7 + $0x18] sm:$0xff] %v53
    // Predicated region
    $region18: #{positional_encoding_forward.1} parent=1 // pred_check
      _
    $region19: #{positional_encoding_forward.1} parent=1 // pred_check_branch
      %59 = sbr.rel (0) target = $region21
    $region20: #{positional_encoding_forward.1} parent=1 // pred_region
      %61 = vsyncadd [#allocation4], 0
      %s62 = sshll.u32 [#allocation7], 4
      %s63 = int_to_ptr.vmem [resolvable:$true] %s62
      %s64 = sshll.u32 %s2, 4
      %s65 = int_to_ptr.hbm [resolvable:$true] %s64
      %70 = dma.vmem_to_hbm [thread:$0]  %s63, 512, %s65, [#allocation4], 256, 256, 16
    $region21: #{positional_encoding_forward.1} parent=1 // pred_fallthru
      _
    // Predicated region
    $region22: #{positional_encoding_forward.1} parent=1 // pred_check
      _
    $region23: #{positional_encoding_forward.1} parent=1 // pred_check_branch
      %72 = sbr.rel (0) target = $region25
    $region24: #{positional_encoding_forward.1} parent=1 // pred_region
      %74 = dma.done [#allocation4], 512
    $region25: #{positional_encoding_forward.1} parent=1 // pred_fallthru
      _
    %75 = vsyncpa [#allocation3], 1
    %76 = vsyncpa [#allocation6], 1
    %77 = vsyncpa [#allocation4], 1

</llo_original>
